<compile_context>
chip_gen: v7x
topology: tpu7x:2x2x1
jax: 0.10.0
libtpu: 0.0.40
codegen_flags: <defaults>
</compile_context>

<pallas_src>
import functools

import jax
import jax.numpy as jnp
from jax.experimental import pallas as pl
from jax.experimental.pallas import tpu as pltpu


def _topk_accuracy_kernel(
    pred_ref, lab_ref, out_ref, count_ref, *, topk: int, batch_total: int, tile_b: int
):
    i = pl.program_id(0)

    @pl.when(i == 0)
    def _():
        count_ref[...] = jnp.zeros_like(count_ref)

    # DMA happens in pred's native dtype; compute in f32 (safe on v5e's VPU, no-op for f32).
    pred = pred_ref[...].astype(jnp.float32)          # (TB, C)
    lab = lab_ref[...]                                # (TB, 1) i32
    TB, C = pred.shape

    col = jax.lax.broadcasted_iota(jnp.int32, (TB, C), 1)          # class indices
    onehot = col == lab                                            # (TB, C) bool

    # Score of the true label for each row via masked reduction.
    label_score = jnp.sum(
        jnp.where(onehot, pred, jnp.zeros_like(pred)), axis=1, keepdims=True
    )                                                              # (TB, 1)

    # Fused rank: count of entries that rank strictly ahead of the label
    # (strictly greater score, or equal score at a lower class index).
    beats = (pred > label_score) | ((pred == label_score) & (col < lab))
    rank = jnp.sum(beats.astype(jnp.float32), axis=1, keepdims=True)   # (TB, 1)

    # Mask padded rows when batch_total is not a multiple of the tile size.
    row = jax.lax.broadcasted_iota(jnp.int32, (TB, 1), 0) + i * tile_b
    valid = row < batch_total

    correct = (rank < jnp.float32(topk)) & valid                   # (TB, 1) bool
    count_ref[...] += jnp.sum(correct.astype(jnp.float32))

    @pl.when(i == pl.num_programs(0) - 1)
    def _():
        out_ref[...] = count_ref[...] * jnp.float32(100.0 / batch_total)


def topk_accuracy(
    pred: jax.Array, lab: jax.Array, topk: int = 1, tile_b: int | None = None
) -> jax.Array:
    """Pallas equivalent of TopKAccuracy.calculate(pred, lab, topk)."""
    B, C = pred.shape
    itemsize = jnp.dtype(pred.dtype).itemsize

    if tile_b is None:
        # ~4 MiB per pred tile buffer -> ~8 MiB double-buffered; comfortably inside the
        # scoped VMEM limit on v5e/v6e/v7x alike.
        budget_bytes = 4 * 1024 * 1024
        rows = max(8, budget_bytes // max(C * itemsize, 1))
        tile_b = min(B, rows)
    if tile_b >= B:
        tile_b = B          # full-extent block is always layout-legal
    else:
        tile_b = max(8, (tile_b // 8) * 8)   # keep (8, 128) sublane alignment

    grid = (pl.cdiv(B, tile_b),)
    lab_2d = lab.reshape(B, 1).astype(jnp.int32)

    kernel = functools.partial(
        _topk_accuracy_kernel, topk=topk, batch_total=B, tile_b=tile_b
    )

    cost = pl.CostEstimate(
        flops=6 * B * C,                 # compares + reduces, a few ops per element
        transcendentals=0,
        bytes_accessed=B * C * itemsize + B * 4 + 4,
    )

    out = pl.pallas_call(
        kernel,
        out_shape=jax.ShapeDtypeStruct((1, 1), jnp.float32),
        grid_spec=pltpu.PrefetchScalarGridSpec(
            num_scalar_prefetch=0,
            grid=grid,
            in_specs=[
                pl.BlockSpec((tile_b, C), lambda i: (i, 0)),
                pl.BlockSpec((tile_b, 1), lambda i: (i, 0)),
            ],
            out_specs=pl.BlockSpec((1, 1), lambda i: (0, 0)),
            scratch_shapes=[pltpu.VMEM((1, 1), jnp.float32)],
        ),
        compiler_params=pltpu.CompilerParams(
            # Serial accumulator on the shared output block -> batch axis is "arbitrary".
            dimension_semantics=("arbitrary",),
            vmem_limit_bytes=32 * 1024 * 1024,
        ),
        cost_estimate=cost,
    )(pred, lab_2d)
    return out.reshape(1)   # matches torch output shape (1,)


def _reference_topk_accuracy(pred, lab, topk):
    """Pure-JAX reference mirroring the torch implementation."""
    _, idx = jax.lax.top_k(pred.astype(jnp.float32), topk)   # (B, topk)
    correct = jnp.any(idx == lab[:, None], axis=1)           # (B,)
    return (jnp.sum(correct.astype(jnp.float32)) * (100.0 / pred.shape[0])).reshape(1)


if __name__ == "__main__":
    key = jax.random.PRNGKey(0)
    k1, k2, k3, k4 = jax.random.split(key, 4)

    # Case 1: small single-tile problem (matches the original test shapes).
    B, C, TOPK = 8, 32, 5
    pred = jax.random.normal(k1, (B, C), dtype=jnp.float32)
    lab = jax.random.randint(k2, (B,), 0, C, dtype=jnp.int32)
    out = jax.block_until_ready(topk_accuracy(pred, lab, topk=TOPK))
    ref = _reference_topk_accuracy(pred, lab, TOPK)
    assert out.shape == (1,)
    assert jnp.allclose(out, ref, atol=1e-5), (out, ref)

    # Case 2: multi-tile batch grid with a padded last tile (B not a multiple of tile_b),
    # exercising the accumulator + row masking path.
    B2, C2, TOPK2 = 12, 128, 3
    pred2 = jax.random.normal(k3, (B2, C2), dtype=jnp.float32)
    lab2 = jax.random.randint(k4, (B2,), 0, C2, dtype=jnp.int32)
    out2 = jax.block_until_ready(topk_accuracy(pred2, lab2, topk=TOPK2, tile_b=8))
    ref2 = _reference_topk_accuracy(pred2, lab2, TOPK2)
    assert jnp.allclose(out2, ref2, atol=1e-5), (out2, ref2)

    print("KERNEL_OK")
</pallas_src>

<mosaic_0001>
module attributes {stable_mosaic.version = 11 : i64} {
  func.func @_topk_accuracy_kernel(%arg0: i32, %arg1: memref<8x32xf32, #tpu.memory_space<vmem>>, %arg2: memref<8x1xi32, #tpu.memory_space<vmem>>, %arg3: memref<1x1xf32, #tpu.memory_space<vmem>>, %arg4: memref<1x1xf32, #tpu.memory_space<vmem>>) attributes {dimension_semantics = [#tpu.dimension_semantics<arbitrary>], iteration_bounds = array<i64: 1>, scalar_prefetch = 0 : i64, scratch_operands = 1 : i64, tpu.core_type = #tpu.core_type<tc>, window_params = [{transform_indices = @transform_0, window_bounds = array<i64: 8, 32>}, {transform_indices = @transform_1, window_bounds = array<i64: 8, 1>}, {pipeline_mode = #tpu.pipeline_mode<synchronous>, transform_indices = @transform_2, window_bounds = array<i64: 1, 1>}]} {
    %c0_i32 = arith.constant 0 : i32
    %0 = arith.cmpi eq, %arg0, %c0_i32 : i32
    %1 = arith.extui %0 : i1 to i32
    %c0_i32_0 = arith.constant 0 : i32
    %2 = arith.cmpi ne, %1, %c0_i32_0 : i32
    scf.if %2 {
      %cst_15 = arith.constant 0.000000e+00 : f32
      %46 = vector.broadcast %cst_15 : f32 to vector<1x1xf32>
      %c0_16 = arith.constant 0 : index
      %c0_17 = arith.constant 0 : index
      %47 = vector.load %arg4[%c0_16, %c0_17] : memref<1x1xf32, #tpu.memory_space<vmem>>, vector<1x1xf32>
      tpu.vector_store %arg4[%c0_16, %c0_17], %46 {strides = array<i32>} : memref<1x1xf32, #tpu.memory_space<vmem>>, vector<1x1xf32>,
    } else {
    }
    %c0 = arith.constant 0 : index
    %c0_1 = arith.constant 0 : index
    %3 = vector.load %arg1[%c0, %c0_1] : memref<8x32xf32, #tpu.memory_space<vmem>>, vector<8x32xf32>
    %c0_2 = arith.constant 0 : index
    %c0_3 = arith.constant 0 : index
    %4 = vector.load %arg2[%c0_2, %c0_3] : memref<8x1xi32, #tpu.memory_space<vmem>>, vector<8x1xi32>
    %5 = tpu.iota {dimensions = array<i32: 1>} : vector<8x32xi32>
    %6 = vector.broadcast %4 : vector<8x1xi32> to vector<8x32xi32>
    %7 = arith.cmpi eq, %5, %6 : vector<8x32xi32>
    %cst = arith.constant 0.000000e+00 : f32
    %8 = vector.broadcast %cst : f32 to vector<8x32xf32>
    %9 = arith.select %7, %3, %8 : vector<8x32xi1>, vector<8x32xf32>
    %cst_4 = arith.constant dense<0.000000e+00> : vector<8xf32>
    %10 = vector.multi_reduction <add>, %9, %cst_4 [1] : vector<8x32xf32> to vector<8xf32>
    %11 = vector.shape_cast %10 : vector<8xf32> to vector<8x1xf32>
    %12 = vector.broadcast %11 : vector<8x1xf32> to vector<8x32xf32>
    %13 = arith.cmpf ogt, %3, %12 : vector<8x32xf32>
    %14 = vector.broadcast %11 : vector<8x1xf32> to vector<8x32xf32>
    %15 = arith.cmpf oeq, %3, %14 : vector<8x32xf32>
    %16 = vector.broadcast %4 : vector<8x1xi32> to vector<8x32xi32>
    %17 = arith.cmpi slt, %5, %16 : vector<8x32xi32>
    %18 = arith.andi %15, %17 : vector<8x32xi1>
    %19 = arith.ori %13, %18 : vector<8x32xi1>
    %20 = arith.extui %19 : vector<8x32xi1> to vector<8x32xi32>
    %21 = arith.sitofp %20 : vector<8x32xi32> to vector<8x32xf32>
    %cst_5 = arith.constant dense<0.000000e+00> : vector<8xf32>
    %22 = vector.multi_reduction <add>, %21, %cst_5 [1] : vector<8x32xf32> to vector<8xf32>
    %23 = vector.shape_cast %22 : vector<8xf32> to vector<8x1xf32>
    %24 = tpu.iota {dimensions = array<i32: 0>} : vector<8x1xi32>
    %c8_i32 = arith.constant 8 : i32
    %25 = arith.muli %arg0, %c8_i32 : i32
    %26 = vector.broadcast %25 : i32 to vector<8x1xi32>
    %27 = arith.addi %24, %26 : vector<8x1xi32>
    %c8_i32_6 = arith.constant 8 : i32
    %28 = vector.broadcast %c8_i32_6 : i32 to vector<8x1xi32>
    %29 = arith.cmpi slt, %27, %28 : vector<8x1xi32>
    %cst_7 = arith.constant 5.000000e+00 : f32
    %30 = vector.broadcast %cst_7 : f32 to vector<8x1xf32>
    %31 = arith.cmpf olt, %23, %30 : vector<8x1xf32>
    %32 = arith.andi %31, %29 : vector<8x1xi1>
    %c0_8 = arith.constant 0 : index
    %c0_9 = arith.constant 0 : index
    %33 = vector.load %arg4[%c0_8, %c0_9] : memref<1x1xf32, #tpu.memory_space<vmem>>, vector<1x1xf32>
    %34 = arith.extui %32 : vector<8x1xi1> to vector<8x1xi32>
    %35 = arith.sitofp %34 : vector<8x1xi32> to vector<8x1xf32>
    %36 = vector.shape_cast %35 : vector<8x1xf32> to vector<1x8x1xf32>
    %cst_10 = arith.constant dense<0.000000e+00> : vector<1xf32>
    %37 = vector.multi_reduction <add>, %36, %cst_10 [1, 2] : vector<1x8x1xf32> to vector<1xf32>
    %38 = vector.shape_cast %37 : vector<1xf32> to vector<1x1x1xf32>
    %39 = vector.extract %38[0, 0, 0] : f32 from vector<1x1x1xf32>
    %40 = vector.broadcast %39 : f32 to vector<1x1xf32>
    %41 = arith.addf %33, %40 : vector<1x1xf32>
    %c0_11 = arith.constant 0 : index
    %c0_12 = arith.constant 0 : index
    %42 = vector.load %arg4[%c0_11, %c0_12] : memref<1x1xf32, #tpu.memory_space<vmem>>, vector<1x1xf32>
    tpu.vector_store %arg4[%c0_11, %c0_12], %41 {strides = array<i32>} : memref<1x1xf32, #tpu.memory_space<vmem>>, vector<1x1xf32>,
    %c0_i32_13 = arith.constant 0 : i32
    %43 = arith.cmpi eq, %arg0, %c0_i32_13 : i32
    %44 = arith.extui %43 : i1 to i32
    %c0_i32_14 = arith.constant 0 : i32
    %45 = arith.cmpi ne, %44, %c0_i32_14 : i32
    scf.if %45 {
      %c0_15 = arith.constant 0 : index
      %c0_16 = arith.constant 0 : index
      %46 = vector.load %arg4[%c0_15, %c0_16] : memref<1x1xf32, #tpu.memory_space<vmem>>, vector<1x1xf32>
      %cst_17 = arith.constant 1.250000e+01 : f32
      %47 = vector.broadcast %cst_17 : f32 to vector<1x1xf32>
      %48 = arith.mulf %46, %47 : vector<1x1xf32>
      %c0_18 = arith.constant 0 : index
      %c0_19 = arith.constant 0 : index
      %49 = vector.load %arg3[%c0_18, %c0_19] : memref<1x1xf32, #tpu.memory_space<vmem>>, vector<1x1xf32>
      tpu.vector_store %arg3[%c0_18, %c0_19], %48 {strides = array<i32>} : memref<1x1xf32, #tpu.memory_space<vmem>>, vector<1x1xf32>,
    } else {
    }
    return
  }
  func.func @transform_0(%arg0: i32) -> (i32, i32) {
    %c0_i32 = arith.constant 0 : i32
    %c0_i32_0 = arith.constant 0 : i32
    return %arg0, %c0_i32 : i32, i32
  }
  func.func @transform_1(%arg0: i32) -> (i32, i32) {
    %c0_i32 = arith.constant 0 : i32
    %c0_i32_0 = arith.constant 0 : i32
    return %arg0, %c0_i32 : i32, i32
  }
  func.func @transform_2(%arg0: i32) -> (i32, i32) {
    %c0_i32 = arith.constant 0 : i32
    %c0_i32_0 = arith.constant 0 : i32
    %c0_i32_1 = arith.constant 0 : i32
    return %c0_i32, %c0_i32_0 : i32, i32
  }
}

</mosaic_0001>

<llo_original>
// kernel: tpu_custom_call.1
$region0: #{tpu_custom_call.1}
  #allocation0 [shape = 'u32[]', space=smem, size = 0x4, offset = 0x4, fixed_abs, tag = 'smem constant byte address 0x4 - core index']
  #allocation1 [shape = 'u32[144,128]{1,0:T(1,128)}', space=vmem, size = 0x12000, scoped, tag = 'internal scratch']
  #allocation2 [shape = 'f32[1,1]{1,0:T(1,128)}', space=vmem, size = 0x200, scoped, tag = 'scratch operand']
  %s0 = inlined_call_operand.vmem [shape: f32[8,32], index: 0, kind: input, shape index: {}]
  %s1 = inlined_call_operand.vmem [shape: s32[8,1], index: 1, kind: input, shape index: {}]
  %s2 = inlined_call_operand.hbm [shape: f32[1,1], index: 2, kind: output, shape index: {}]
  %s3 = sld [smem:[#allocation0]]
  $region26: #{tpu_custom_call.1} parent=0
    _
  %s5 = ssub.s32 1, %s3
  %s6 = scalar_select 0, %s5, %s3
  $region1: #{tpu_custom_call.1} parent=0
    #allocation3 [shape = 'u8[512]{0}', space=vmem, size = 0x400, scoped, tag = 'output window, operand 0, single buffered']
    #allocation4 [shape = 's32[1]{0}', space=sflag, size = 0x4, scoped, tag = 'scoped memory for tpu_custom_call.1']
    %7 = vsyncpa [#allocation4], 0
    // Predicated region
    $region2: #{tpu_custom_call.1} parent=1 // pred_check
      _
    $region3: #{tpu_custom_call.1} parent=1 // pred_check_branch
      %9 = sbr.rel (0) target = $region5
    $region4: #{tpu_custom_call.1} parent=1 // pred_region
      _
    $region5: #{tpu_custom_call.1} parent=1 // pred_fallthru
      _
    // Predicated region
    $region6: #{tpu_custom_call.1} parent=1 // pred_check
      _
    $region7: #{tpu_custom_call.1} parent=1 // pred_check_branch
      %11 = sbr.rel (0) target = $region9
    $region8: #{tpu_custom_call.1} parent=1 // pred_region
      _
    $region9: #{tpu_custom_call.1} parent=1 // pred_fallthru
      _
    %p12 = scmp.eq.s32.totalorder 0, 0
    // Predicated region
    $region10: #{tpu_custom_call.1} parent=1 // pred_check
      %p13 = pneg %p12
    $region11: #{tpu_custom_call.1} parent=1 // pred_check_branch
      %15 = sbr.rel (%p13) target = $region13
    $region12: #{tpu_custom_call.1} parent=1 // pred_region
      %vm16 = vcmask 0
      %17 = vst.msk [vmem:[#allocation2] sm:$0x1] %vm16, 0.0
    $region13: #{tpu_custom_call.1} parent=1 // pred_fallthru
      _
    %v18 = vld [vmem:[%s0] sm:$0xff]
    %v19 = vld [vmem:[%s1] sm:$0xff]
    %v20 = vlaneseq
    %v21 = vand.u32 %v20, 127
    %22 = vset.pattern.permute.xlu0 0
    %23 = vperm.xlu0 %22, %v19
    %v24 = vpop.permute.xlu0 %23
    %vm25 = vcmp.eq.s32.totalorder %v21, %v24
    %v26 = vsel %vm25, %v18, 0.0
    %vm27 = vcmask 261120
    %v28 = vsel %vm27, %v26, 0.0
    %29 = vadd.xlane.f32.xlu0 %v28
    %v30 = vpop.xlane.xlu0 %29
    %vm31 = vcmp.gt.f32.partialorder %v18, %v30
    %vm32 = vcmp.eq.f32.partialorder %v18, %v30
    %vm33 = vcmp.lt.s32.totalorder %v21, %v24
    %vm34 = vmand %vm32, %vm33
    %vm35 = vmor %vm31, %vm34
    %v36 = vsel %vm35, 1, 0
    %v37 = vcvt.s32.f32 %v36
    %v38 = vsel %vm27, %v37, 0.0
    %39 = vadd.xlane.f32.xlu0 %v38
    %v40 = vpop.xlane.xlu0 %39
    %v41 = vlaneseq
    %v42 = vshrl.u32 %v41, 7
    %s43 = smul.u32 0, 8
    %v44 = vstv %s43
    %v45 = vadd.s32 %v42, %v44
    %vm46 = vcmp.lt.s32.totalorder %v45, 8
    %vm47 = vcmp.lt.f32.partialorder %v40, 5.0
    %vm48 = vmand %vm47, %vm46
    %v49 = vld [vmem:[#allocation2] sm:$0x1]
    %v50 = vsel %vm48, 1, 0
    %v51 = vcvt.s32.f32 %v50
    %vm52 = vcmask 7168
    %v53 = vsel %vm52, %v51, 0.0
    %54 = vadd.xlane.f32.xlu0 %v53
    %v55 = vpop.xlane.xlu0 %54
    %v56 = vrot.slane %v55, 4
    %v57 = vadd.f32 %v55, %v56
    %v58 = vrot.slane %v57, 2
    %v59 = vadd.f32 %v57, %v58
    %v60 = vrot.slane %v59, 1
    %v61 = vadd.f32 %v59, %v60
    %s62 = vtos %v61
    %v63 = vstv %s62
    %v64 = vadd.f32 %v49, %v63
    %vm65 = vcmask 0
    %66 = vst.msk [vmem:[#allocation2] sm:$0x1] %vm65, %v64
    // Predicated region
    $region14: #{tpu_custom_call.1} parent=1 // pred_check
      %p67 = pneg %p12
    $region15: #{tpu_custom_call.1} parent=1 // pred_check_branch
      %69 = sbr.rel (%p67) target = $region17
    $region16: #{tpu_custom_call.1} parent=1 // pred_region
      %v70 = vld [vmem:[#allocation2] sm:$0x1]
      %v71 = vmul.f32 %v70, 12.5
      %72 = vst.msk [vmem:[#allocation3] sm:$0x1] %vm65, %v71
    $region17: #{tpu_custom_call.1} parent=1 // pred_fallthru
      _
    // Predicated region
    $region18: #{tpu_custom_call.1} parent=1 // pred_check
      _
    $region19: #{tpu_custom_call.1} parent=1 // pred_check_branch
      %74 = sbr.rel (0) target = $region21
    $region20: #{tpu_custom_call.1} parent=1 // pred_region
      %s76 = ssub.s32 16, 16
      %77 = vsyncadd [#allocation4], %s76
      %s79 = sshll.u32 [#allocation3], 4
      %s80 = int_to_ptr.vmem [resolvable:$true] %s79
      %82 = dma.vmem_to_hbm [thread:$0]  %s80, 16, %s2, [#allocation4]
    $region21: #{tpu_custom_call.1} parent=1 // pred_fallthru
      _
    // Predicated region
    $region22: #{tpu_custom_call.1} parent=1 // pred_check
      _
    $region23: #{tpu_custom_call.1} parent=1 // pred_check_branch
      %84 = sbr.rel (0) target = $region25
    $region24: #{tpu_custom_call.1} parent=1 // pred_region
      %85 = dma.done [#allocation4], 16
    $region25: #{tpu_custom_call.1} parent=1 // pred_fallthru
      _
    %86 = vsyncpa [#allocation4], 1

</llo_original>
